<compile_context>
chip_gen: v7x
topology: tpu7x:2x2x1
jax: 0.10.0
libtpu: 0.0.40
codegen_flags: <defaults>
</compile_context>

<pallas_src>
from functools import partial

import jax
import jax.numpy as jnp
from jax.experimental import pallas as pl
from jax.experimental.pallas import tpu as pltpu


def _ak_layer_kernel(scal_ref, adj_ref, h_ref, out_ref, *, mxu_dtype):
    # scal_ref: SMEM f32[2] = [alpha, beta], computed host-side.
    alpha = scal_ref[0]
    beta = scal_ref[1]

    adj = adj_ref[...]            # [Np, Np] f32 (zero-padded)
    h = h_ref[...]                # [Np, Fp] f32 (zero-padded)

    # Degree of Ak = alpha*I + beta*adj without materializing Ak:
    #   deg[i] = alpha + beta * sum_j adj[i, j]
    deg = alpha + beta * jnp.sum(adj, axis=1, keepdims=True)   # [Np, 1]
    d = jax.lax.rsqrt(deg)                                     # deg ** -0.5
    d = jnp.where(jnp.isinf(d), jnp.zeros_like(d), d)          # isolated nodes

    # D^{-1/2} (alpha*I + beta*adj) D^{-1/2} @ h
    #   = alpha * (d*d) * h + beta * d * (adj @ (d * h))
    dh = d * h                                                 # [Np, Fp]
    agg = jnp.dot(adj.astype(mxu_dtype), dh.astype(mxu_dtype),
                  preferred_element_type=jnp.float32)          # MXU [Np, Fp]
    out_ref[...] = alpha * (d * d) * h + beta * d * agg


def _round_up(x, m):
    return max(m, ((x + m - 1) // m) * m)


def ak_layer(h, adj, ident, lambda_param, *, use_bf16_mxu=False):
    """Forward of AKLayer.  h: [N, F], adj: [N, N], ident: [N, N] (unused:
    the alpha*I term is handled algebraically), lambda_param: scalar."""
    del ident  # accepted for API parity with the PyTorch module; never DMA'd
    n, f = h.shape
    assert adj.shape == (n, n)

    # Scalar prologue on the host/XLA side (off the kernel's vector path).
    lam = jnp.asarray(lambda_param, dtype=jnp.float32)
    lambda_max = 1.0 + jnp.maximum(lam, 0.0)        # 1 + relu(lambda_)
    alpha = (2.0 * lambda_max - 2.0) / lambda_max
    beta = 2.0 / lambda_max
    scal = jnp.stack([alpha, beta]).astype(jnp.float32)   # SMEM f32[2]

    # Pad to MXU / lane-friendly shapes (multiples of 128).  Zero padding adds
    # zero rows/cols that provably produce zero output rows/cols (sliced off).
    np_ = _round_up(n, 128)
    fp_ = _round_up(f, 128)
    adj_p = jnp.pad(adj.astype(jnp.float32), ((0, np_ - n), (0, np_ - n)))
    h_p = jnp.pad(h.astype(jnp.float32), ((0, np_ - n), (0, fp_ - f)))

    cost = pl.CostEstimate(
        flops=2 * np_ * np_ * fp_ + 8 * np_ * fp_ + 2 * np_ * np_,
        transcendentals=np_,
        bytes_accessed=4 * (np_ * np_ + 2 * np_ * fp_) + 8,
    )

    mxu_dtype = jnp.bfloat16 if use_bf16_mxu else jnp.float32

    out_p = pl.pallas_call(
        partial(_ak_layer_kernel, mxu_dtype=mxu_dtype),
        out_shape=jax.ShapeDtypeStruct((np_, fp_), jnp.float32),
        in_specs=[
            pl.BlockSpec(memory_space=pltpu.MemorySpace.SMEM),  # [alpha, beta]
            pl.BlockSpec((np_, np_), lambda: (0, 0)),           # adj (padded)
            pl.BlockSpec((np_, fp_), lambda: (0, 0)),           # h   (padded)
        ],
        out_specs=pl.BlockSpec((np_, fp_), lambda: (0, 0)),
        cost_estimate=cost,
    )(scal, adj_p, h_p)

    return out_p[:n, :f]


def ak_layer_ref(h, adj, ident, lambda_param):
    """Pure-JAX reference mirroring the PyTorch forward."""
    lambda_max = 1.0 + jnp.maximum(lambda_param, 0.0)
    alpha = (2.0 * lambda_max - 2.0) / lambda_max * ident
    beta = 2.0 / lambda_max * adj
    ak = alpha + beta
    row_sum = ak.sum(1)
    d_inv_sqrt = jnp.power(row_sum, -0.5)
    d_inv_sqrt = jnp.where(jnp.isinf(d_inv_sqrt), 0.0, d_inv_sqrt)
    d_mat = jnp.diag(d_inv_sqrt)
    a_norm = d_mat @ ak @ d_mat
    return a_norm @ h


if __name__ == "__main__":
    key = jax.random.PRNGKey(0)
    k1, k2 = jax.random.split(key)

    N, F = 64, 32  # small graph: 64 nodes, 32 features

    # deterministic synthetic inputs
    h = jax.random.normal(k1, (N, F), dtype=jnp.float32)
    # random symmetric 0/1 adjacency (no self-loops; layer adds alpha*I itself)
    raw = jax.random.uniform(k2, (N, N), dtype=jnp.float32)
    adj = jnp.where((raw + raw.T) * 0.5 > 0.7, 1.0, 0.0).astype(jnp.float32)
    adj = adj * (1.0 - jnp.eye(N, dtype=jnp.float32))
    ident = jnp.eye(N, dtype=jnp.float32)

    # parameter init exactly as in the module: lambda_ = 1.0
    lambda_param = jnp.asarray(1.0, dtype=jnp.float32)

    out = ak_layer(h, adj, ident, lambda_param)
    out = jax.block_until_ready(out)

    ref = ak_layer_ref(h, adj, ident, lambda_param)
    assert out.shape == (N, F)
    assert jnp.allclose(out, ref, atol=1e-4, rtol=1e-4), "mismatch vs reference"

    print("KERNEL_OK")
</pallas_src>

<mosaic_0001>
module attributes {stable_mosaic.version = 11 : i64} {
  func.func @_ak_layer_kernel(%arg0: memref<2xf32, #tpu.memory_space<smem>>, %arg1: memref<128x128xf32, #tpu.memory_space<vmem>>, %arg2: memref<128x128xf32, #tpu.memory_space<vmem>>, %arg3: memref<128x128xf32, #tpu.memory_space<vmem>>) attributes {dimension_semantics = [], scalar_prefetch = 0 : i64, scratch_operands = 0 : i64, tpu.core_type = #tpu.core_type<tc>} {
    %c0 = arith.constant 0 : index
    %0 = memref.load %arg0[%c0] : memref<2xf32, #tpu.memory_space<smem>>
    %c1 = arith.constant 1 : index
    %1 = memref.load %arg0[%c1] : memref<2xf32, #tpu.memory_space<smem>>
    %c0_0 = arith.constant 0 : index
    %c0_1 = arith.constant 0 : index
    %2 = vector.load %arg1[%c0_0, %c0_1] : memref<128x128xf32, #tpu.memory_space<vmem>>, vector<128x128xf32>
    %c0_2 = arith.constant 0 : index
    %c0_3 = arith.constant 0 : index
    %3 = vector.load %arg2[%c0_2, %c0_3] : memref<128x128xf32, #tpu.memory_space<vmem>>, vector<128x128xf32>
    %cst = arith.constant dense<0.000000e+00> : vector<128xf32>
    %4 = vector.multi_reduction <add>, %2, %cst [1] : vector<128x128xf32> to vector<128xf32>
    %5 = vector.shape_cast %4 : vector<128xf32> to vector<128x1xf32>
    %6 = vector.broadcast %1 : f32 to vector<128x1xf32>
    %7 = arith.mulf %6, %5 : vector<128x1xf32>
    %8 = vector.broadcast %0 : f32 to vector<128x1xf32>
    %9 = arith.addf %8, %7 : vector<128x1xf32>
    %10 = math.rsqrt %9 : vector<128x1xf32>
    %11 = math.absf %10 : vector<128x1xf32>
    %cst_4 = arith.constant 0x7F800000 : f32
    %12 = vector.broadcast %cst_4 : f32 to vector<128x1xf32>
    %13 = arith.cmpf oeq, %11, %12 : vector<128x1xf32>
    %cst_5 = arith.constant 0.000000e+00 : f32
    %14 = vector.broadcast %cst_5 : f32 to vector<128x1xf32>
    %15 = arith.select %13, %14, %10 : vector<128x1xi1>, vector<128x1xf32>
    %16 = vector.broadcast %15 : vector<128x1xf32> to vector<128x128xf32>
    %17 = arith.mulf %16, %3 : vector<128x128xf32>
    %cst_6 = arith.constant dense<0.000000e+00> : vector<128x128xf32>
    %18 = tpu.matmul %2, %17, %cst_6 {dimension_numbers = #tpu.dot_dimension_numbers<[1], [0], [0], [1], [0, 0, 1, 1], [], []>} : vector<128x128xf32>, vector<128x128xf32>, vector<128x128xf32> -> vector<128x128xf32>
    %19 = arith.mulf %15, %15 : vector<128x1xf32>
    %20 = vector.broadcast %0 : f32 to vector<128x1xf32>
    %21 = arith.mulf %20, %19 : vector<128x1xf32>
    %22 = vector.broadcast %21 : vector<128x1xf32> to vector<128x128xf32>
    %23 = arith.mulf %22, %3 : vector<128x128xf32>
    %24 = vector.broadcast %1 : f32 to vector<128x1xf32>
    %25 = arith.mulf %24, %15 : vector<128x1xf32>
    %26 = vector.broadcast %25 : vector<128x1xf32> to vector<128x128xf32>
    %27 = arith.mulf %26, %18 : vector<128x128xf32>
    %28 = arith.addf %23, %27 : vector<128x128xf32>
    %c0_7 = arith.constant 0 : index
    %c0_8 = arith.constant 0 : index
    %29 = vector.load %arg3[%c0_7, %c0_8] : memref<128x128xf32, #tpu.memory_space<vmem>>, vector<128x128xf32>
    tpu.vector_store %arg3[%c0_7, %c0_8], %28 {strides = array<i32>} : memref<128x128xf32, #tpu.memory_space<vmem>>, vector<128x128xf32>,
    return
  }
}

</mosaic_0001>

<llo_original>
// kernel: tpu_custom_call.1
$region0: #{tpu_custom_call.1}
  #allocation0 [shape = 'u32[]', space=smem, size = 0x4, offset = 0x4, fixed_abs, tag = 'smem constant byte address 0x4 - core index']
  #allocation1 [shape = 'u32[144,128]{1,0:T(1,128)}', space=vmem, size = 0x12000, scoped, tag = 'internal scratch']
  %s0 = inlined_call_operand.hbm [shape: f32[2], index: 0, kind: input, shape index: {}]
  %s1 = inlined_call_operand.hbm [shape: f32[128,128], index: 1, kind: input, shape index: {}]
  %s2 = inlined_call_operand.hbm [shape: f32[128,128], index: 2, kind: input, shape index: {}]
  %s3 = inlined_call_operand.hbm [shape: f32[128,128], index: 3, kind: output, shape index: {}]
  %s4 = sld [smem:[#allocation0]]
  $region34: #{tpu_custom_call.1} parent=0
    _
  %s6 = ssub.s32 1, %s4
  %s7 = scalar_select 0, %s6, %s4
  $region1: #{tpu_custom_call.1} parent=0
    #allocation2 [shape = 'u8[512]{0}', space=smem, size = 0x200, scoped, tag = 'input window, operand 0, single buffered']
    #allocation3 [shape = 's32[1]{0}', space=sflag, size = 0x4, scoped, tag = 'scoped memory for tpu_custom_call.1']
    #allocation4 [shape = 's32[1]{0}', space=sflag, size = 0x4, scoped, tag = 'scoped memory for tpu_custom_call.1']
    #allocation5 [shape = 's32[1]{0}', space=sflag, size = 0x4, scoped, tag = 'scoped memory for tpu_custom_call.1']
    #allocation6 [shape = 'u8[65536]{0}', space=vmem, size = 0x10000, scoped, tag = 'input window, operand 1, single buffered']
    #allocation7 [shape = 'u8[65536]{0}', space=vmem, size = 0x10000, scoped, tag = 'input window, operand 2, single buffered']
    #allocation8 [shape = 's32[1]{0}', space=sflag, size = 0x4, scoped, tag = 'scoped memory for tpu_custom_call.1']
    #allocation9 [shape = 'u8[65536]{0}', space=vmem, size = 0x10000, scoped, tag = 'output window, operand 0, single buffered']
    %8 = vsyncpa [#allocation5], 0
    %9 = vsyncpa [#allocation3], 0
    %10 = vsyncpa [#allocation8], 0
    %11 = vsyncpa [#allocation4], 0
    // Predicated region
    $region2: #{tpu_custom_call.1} parent=1 // pred_check
      _
    $region3: #{tpu_custom_call.1} parent=1 // pred_check_branch
      %13 = sbr.rel (0) target = $region5
    $region4: #{tpu_custom_call.1} parent=1 // pred_region
      %s15 = ssub.s32 16, 16
      %16 = vsyncadd [#allocation5], %s15
      %19 = dma.hbm_to_smem %s0, 16, [#allocation2], [#allocation5]
    $region5: #{tpu_custom_call.1} parent=1 // pred_fallthru
      _
    // Predicated region
    $region6: #{tpu_custom_call.1} parent=1 // pred_check
      _
    $region7: #{tpu_custom_call.1} parent=1 // pred_check_branch
      %21 = sbr.rel (0) target = $region9
    $region8: #{tpu_custom_call.1} parent=1 // pred_region
      %s23 = ssub.s32 2048, 2048
      %24 = vsyncadd [#allocation3], %s23
      %s25 = sshll.u32 [#allocation6], 4
      %s26 = int_to_ptr.vmem [resolvable:$true] %s25
      %31 = dma.hbm_to_vmem [thread:$0]  %s1, 2048, %s26, [#allocation3], 128, 128, 8
    $region9: #{tpu_custom_call.1} parent=1 // pred_fallthru
      _
    // Predicated region
    $region10: #{tpu_custom_call.1} parent=1 // pred_check
      _
    $region11: #{tpu_custom_call.1} parent=1 // pred_check_branch
      %33 = sbr.rel (0) target = $region13
    $region12: #{tpu_custom_call.1} parent=1 // pred_region
      %s35 = ssub.s32 2048, 2048
      %36 = vsyncadd [#allocation8], %s35
      %s37 = sshll.u32 [#allocation7], 4
      %s38 = int_to_ptr.vmem [resolvable:$true] %s37
      %43 = dma.hbm_to_vmem [thread:$0]  %s2, 2048, %s38, [#allocation8], 128, 128, 8
    $region13: #{tpu_custom_call.1} parent=1 // pred_fallthru
      _
    // Predicated region
    $region14: #{tpu_custom_call.1} parent=1 // pred_check
      _
    $region15: #{tpu_custom_call.1} parent=1 // pred_check_branch
      %45 = sbr.rel (0) target = $region17
    $region16: #{tpu_custom_call.1} parent=1 // pred_region
      %46 = dma.done [#allocation5], 16
    $region17: #{tpu_custom_call.1} parent=1 // pred_fallthru
      _
    // Predicated region
    $region18: #{tpu_custom_call.1} parent=1 // pred_check
      _
    $region19: #{tpu_custom_call.1} parent=1 // pred_check_branch
      %48 = sbr.rel (0) target = $region21
    $region20: #{tpu_custom_call.1} parent=1 // pred_region
      %49 = dma.done [#allocation3], 2048
    $region21: #{tpu_custom_call.1} parent=1 // pred_fallthru
      _
    // Predicated region
    $region22: #{tpu_custom_call.1} parent=1 // pred_check
      _
    $region23: #{tpu_custom_call.1} parent=1 // pred_check_branch
      %51 = sbr.rel (0) target = $region25
    $region24: #{tpu_custom_call.1} parent=1 // pred_region
      %52 = dma.done [#allocation8], 2048
    $region25: #{tpu_custom_call.1} parent=1 // pred_fallthru
      _
    %53 = sfence
    %s54 = sld [smem:[#allocation2]]
    %s55 = sld [smem:[#allocation2 + $0x1]]
    %v56 = vld [vmem:[#allocation6] sm:$0xff]
    %v57 = vld [vmem:[#allocation6 + $0x8] sm:$0xff]
    %v58 = vld [vmem:[#allocation6 + $0x10] sm:$0xff]
    %v59 = vld [vmem:[#allocation6 + $0x18] sm:$0xff]
    %v60 = vld [vmem:[#allocation6 + $0x20] sm:$0xff]
    %v61 = vld [vmem:[#allocation6 + $0x28] sm:$0xff]
    %v62 = vld [vmem:[#allocation6 + $0x30] sm:$0xff]
    %v63 = vld [vmem:[#allocation6 + $0x38] sm:$0xff]
    %v64 = vld [vmem:[#allocation6 + $0x40] sm:$0xff]
    %v65 = vld [vmem:[#allocation6 + $0x48] sm:$0xff]
    %v66 = vld [vmem:[#allocation6 + $0x50] sm:$0xff]
    %v67 = vld [vmem:[#allocation6 + $0x58] sm:$0xff]
    %v68 = vld [vmem:[#allocation6 + $0x60] sm:$0xff]
    %v69 = vld [vmem:[#allocation6 + $0x68] sm:$0xff]
    %v70 = vld [vmem:[#allocation6 + $0x70] sm:$0xff]
    %v71 = vld [vmem:[#allocation6 + $0x78] sm:$0xff]
    %v72 = vld [vmem:[#allocation7] sm:$0xff]
    %v73 = vld [vmem:[#allocation7 + $0x8] sm:$0xff]
    %v74 = vld [vmem:[#allocation7 + $0x10] sm:$0xff]
    %v75 = vld [vmem:[#allocation7 + $0x18] sm:$0xff]
    %v76 = vld [vmem:[#allocation7 + $0x20] sm:$0xff]
    %v77 = vld [vmem:[#allocation7 + $0x28] sm:$0xff]
    %v78 = vld [vmem:[#allocation7 + $0x30] sm:$0xff]
    %v79 = vld [vmem:[#allocation7 + $0x38] sm:$0xff]
    %v80 = vld [vmem:[#allocation7 + $0x40] sm:$0xff]
    %v81 = vld [vmem:[#allocation7 + $0x48] sm:$0xff]
    %v82 = vld [vmem:[#allocation7 + $0x50] sm:$0xff]
    %v83 = vld [vmem:[#allocation7 + $0x58] sm:$0xff]
    %v84 = vld [vmem:[#allocation7 + $0x60] sm:$0xff]
    %v85 = vld [vmem:[#allocation7 + $0x68] sm:$0xff]
    %v86 = vld [vmem:[#allocation7 + $0x70] sm:$0xff]
    %v87 = vld [vmem:[#allocation7 + $0x78] sm:$0xff]
    %88 = vadd.xlane.f32.xlu0 %v56
    %v89 = vpop.xlane.xlu0 %88
    %90 = vadd.xlane.f32.xlu0 %v57
    %v91 = vpop.xlane.xlu0 %90
    %92 = vadd.xlane.f32.xlu0 %v58
    %v93 = vpop.xlane.xlu0 %92
    %94 = vadd.xlane.f32.xlu0 %v59
    %v95 = vpop.xlane.xlu0 %94
    %96 = vadd.xlane.f32.xlu0 %v60
    %v97 = vpop.xlane.xlu0 %96
    %98 = vadd.xlane.f32.xlu0 %v61
    %v99 = vpop.xlane.xlu0 %98
    %100 = vadd.xlane.f32.xlu0 %v62
    %v101 = vpop.xlane.xlu0 %100
    %102 = vadd.xlane.f32.xlu0 %v63
    %v103 = vpop.xlane.xlu0 %102
    %104 = vadd.xlane.f32.xlu0 %v64
    %v105 = vpop.xlane.xlu0 %104
    %106 = vadd.xlane.f32.xlu0 %v65
    %v107 = vpop.xlane.xlu0 %106
    %108 = vadd.xlane.f32.xlu0 %v66
    %v109 = vpop.xlane.xlu0 %108
    %110 = vadd.xlane.f32.xlu0 %v67
    %v111 = vpop.xlane.xlu0 %110
    %112 = vadd.xlane.f32.xlu0 %v68
    %v113 = vpop.xlane.xlu0 %112
    %114 = vadd.xlane.f32.xlu0 %v69
    %v115 = vpop.xlane.xlu0 %114
    %116 = vadd.xlane.f32.xlu0 %v70
    %v117 = vpop.xlane.xlu0 %116
    %118 = vadd.xlane.f32.xlu0 %v71
    %v119 = vpop.xlane.xlu0 %118
    %v120 = vstv %s55
    %v121 = vmul.f32 %v120, %v89
    %v122 = vmul.f32 %v120, %v91
    %v123 = vmul.f32 %v120, %v93
    %v124 = vmul.f32 %v120, %v95
    %v125 = vmul.f32 %v120, %v97
    %v126 = vmul.f32 %v120, %v99
    %v127 = vmul.f32 %v120, %v101
    %v128 = vmul.f32 %v120, %v103
    %v129 = vmul.f32 %v120, %v105
    %v130 = vmul.f32 %v120, %v107
    %v131 = vmul.f32 %v120, %v109
    %v132 = vmul.f32 %v120, %v111
    %v133 = vmul.f32 %v120, %v113
    %v134 = vmul.f32 %v120, %v115
    %v135 = vmul.f32 %v120, %v117
    %v136 = vmul.f32 %v120, %v119
    %v137 = vstv %s54
    %v138 = vadd.f32 %v137, %v121
    %v139 = vadd.f32 %v137, %v122
    %v140 = vadd.f32 %v137, %v123
    %v141 = vadd.f32 %v137, %v124
    %v142 = vadd.f32 %v137, %v125
    %v143 = vadd.f32 %v137, %v126
    %v144 = vadd.f32 %v137, %v127
    %v145 = vadd.f32 %v137, %v128
    %v146 = vadd.f32 %v137, %v129
    %v147 = vadd.f32 %v137, %v130
    %v148 = vadd.f32 %v137, %v131
    %v149 = vadd.f32 %v137, %v132
    %v150 = vadd.f32 %v137, %v133
    %v151 = vadd.f32 %v137, %v134
    %v152 = vadd.f32 %v137, %v135
    %v153 = vadd.f32 %v137, %v136
    %v154 = vrsqrt.pop %v138
    %v155 = vrsqrt.pop %v139
    %v156 = vrsqrt.pop %v140
    %v157 = vrsqrt.pop %v141
    %v158 = vrsqrt.pop %v142
    %v159 = vrsqrt.pop %v143
    %v160 = vrsqrt.pop %v144
    %v161 = vrsqrt.pop %v145
    %v162 = vrsqrt.pop %v146
    %v163 = vrsqrt.pop %v147
    %v164 = vrsqrt.pop %v148
    %v165 = vrsqrt.pop %v149
    %v166 = vrsqrt.pop %v150
    %v167 = vrsqrt.pop %v151
    %v168 = vrsqrt.pop %v152
    %v169 = vrsqrt.pop %v153
    %v170 = vand.u32 2147483647, %v154
    %v171 = vand.u32 2147483647, %v155
    %v172 = vand.u32 2147483647, %v156
    %v173 = vand.u32 2147483647, %v157
    %v174 = vand.u32 2147483647, %v158
    %v175 = vand.u32 2147483647, %v159
    %v176 = vand.u32 2147483647, %v160
    %v177 = vand.u32 2147483647, %v161
    %v178 = vand.u32 2147483647, %v162
    %v179 = vand.u32 2147483647, %v163
    %v180 = vand.u32 2147483647, %v164
    %v181 = vand.u32 2147483647, %v165
    %v182 = vand.u32 2147483647, %v166
    %v183 = vand.u32 2147483647, %v167
    %v184 = vand.u32 2147483647, %v168
    %v185 = vand.u32 2147483647, %v169
    %vm186 = vcmp.eq.f32.partialorder %v170, inf
    %vm187 = vcmp.eq.f32.partialorder %v171, inf
    %vm188 = vcmp.eq.f32.partialorder %v172, inf
    %vm189 = vcmp.eq.f32.partialorder %v173, inf
    %vm190 = vcmp.eq.f32.partialorder %v174, inf
    %vm191 = vcmp.eq.f32.partialorder %v175, inf
    %vm192 = vcmp.eq.f32.partialorder %v176, inf
    %vm193 = vcmp.eq.f32.partialorder %v177, inf
    %vm194 = vcmp.eq.f32.partialorder %v178, inf
    %vm195 = vcmp.eq.f32.partialorder %v179, inf
    %vm196 = vcmp.eq.f32.partialorder %v180, inf
    %vm197 = vcmp.eq.f32.partialorder %v181, inf
    %vm198 = vcmp.eq.f32.partialorder %v182, inf
    %vm199 = vcmp.eq.f32.partialorder %v183, inf
    %vm200 = vcmp.eq.f32.partialorder %v184, inf
    %vm201 = vcmp.eq.f32.partialorder %v185, inf
    %v202 = vsel %vm186, 0.0, %v154
    %v203 = vsel %vm187, 0.0, %v155
    %v204 = vsel %vm188, 0.0, %v156
    %v205 = vsel %vm189, 0.0, %v157
    %v206 = vsel %vm190, 0.0, %v158
    %v207 = vsel %vm191, 0.0, %v159
    %v208 = vsel %vm192, 0.0, %v160
    %v209 = vsel %vm193, 0.0, %v161
    %v210 = vsel %vm194, 0.0, %v162
    %v211 = vsel %vm195, 0.0, %v163
    %v212 = vsel %vm196, 0.0, %v164
    %v213 = vsel %vm197, 0.0, %v165
    %v214 = vsel %vm198, 0.0, %v166
    %v215 = vsel %vm199, 0.0, %v167
    %v216 = vsel %vm200, 0.0, %v168
    %v217 = vsel %vm201, 0.0, %v169
    %v218 = vmul.f32 %v202, %v72
    %v219 = vmul.f32 %v203, %v73
    %v220 = vmul.f32 %v204, %v74
    %v221 = vmul.f32 %v205, %v75
    %v222 = vmul.f32 %v206, %v76
    %v223 = vmul.f32 %v207, %v77
    %v224 = vmul.f32 %v208, %v78
    %v225 = vmul.f32 %v209, %v79
    %v226 = vmul.f32 %v210, %v80
    %v227 = vmul.f32 %v211, %v81
    %v228 = vmul.f32 %v212, %v82
    %v229 = vmul.f32 %v213, %v83
    %v230 = vmul.f32 %v214, %v84
    %v231 = vmul.f32 %v215, %v85
    %v232 = vmul.f32 %v216, %v86
    %v233 = vmul.f32 %v217, %v87
    %234 = vmatprep.subr.mxu0 0.0
    %235 = vmatpush1.msra.mxu0 %v218
    %236 = vmatprep.subr.mxu0 0.0
    %237 = vmatpush1.msra.mxu0 %v219
    %238 = vmatprep.subr.mxu0 0.0
    %239 = vmatpush1.msra.mxu0 %v220
    %240 = vmatprep.subr.mxu0 0.0
    %241 = vmatpush1.msra.mxu0 %v221
    %242 = vmatprep.subr.mxu0 0.0
    %243 = vmatpush1.msra.mxu0 %v222
    %244 = vmatprep.subr.mxu0 0.0
    %245 = vmatpush1.msra.mxu0 %v223
    %246 = vmatprep.subr.mxu0 0.0
    %247 = vmatpush1.msra.mxu0 %v224
    %248 = vmatprep.subr.mxu0 0.0
    %249 = vmatpush1.msra.mxu0 %v225
    %250 = vmatprep.subr.mxu0 0.0
    %251 = vmatpush1.msra.mxu0 %v226
    %252 = vmatprep.subr.mxu0 0.0
    %253 = vmatpush1.msra.mxu0 %v227
    %254 = vmatprep.subr.mxu0 0.0
    %255 = vmatpush1.msra.mxu0 %v228
    %256 = vmatprep.subr.mxu0 0.0
    %257 = vmatpush1.msra.mxu0 %v229
    %258 = vmatprep.subr.mxu0 0.0
    %259 = vmatpush1.msra.mxu0 %v230
    %260 = vmatprep.subr.mxu0 0.0
    %261 = vmatpush1.msra.mxu0 %v231
    %262 = vmatprep.subr.mxu0 0.0
    %263 = vmatpush1.msra.mxu0 %v232
    %264 = vmatprep.subr.mxu0 0.0
    %265 = vmatpush1.msra.mxu0 %v233
    %266 = vmatprep.subr.mxu0 0.0
    %267 = vmatpush1.msra.mxu0 0.0
    %268 = vmatprep.subr.mxu0 0.0
    %269 = vmatpush1.msra.mxu0 0.0
    %270 = vmatprep.subr.mxu0 0.0
    %271 = vmatpush1.msra.mxu0 0.0
    %272 = vmatprep.subr.mxu0 0.0
    %273 = vmatpush1.msra.mxu0 0.0
    %274 = vmatprep.subr.mxu0 0.0
    %275 = vmatpush1.msra.mxu0 0.0
    %276 = vmatprep.subr.mxu0 0.0
    %277 = vmatpush1.msra.mxu0 0.0
    %278 = vmatprep.subr.mxu0 0.0
    %279 = vmatpush1.msra.mxu0 0.0
    %280 = vmatprep.subr.mxu0 0.0
    %281 = vmatpush1.msra.mxu0 0.0
    %282 = vmatprep.subr.mxu0 0.0
    %283 = vmatpush1.msra.mxu0 0.0
    %284 = vmatprep.subr.mxu0 0.0
    %285 = vmatpush1.msra.mxu0 0.0
    %286 = vmatprep.subr.mxu0 0.0
    %287 = vmatpush1.msra.mxu0 0.0
    %288 = vmatprep.subr.mxu0 0.0
    %289 = vmatpush1.msra.mxu0 0.0
    %290 = vmatprep.subr.mxu0 0.0
    %291 = vmatpush1.msra.mxu0 0.0
    %292 = vmatprep.subr.mxu0 0.0
    %293 = vmatpush1.msra.mxu0 0.0
    %294 = vmatprep.subr.mxu0 0.0
    %295 = vmatpush1.msra.mxu0 0.0
    %296 = vmatprep.subr.mxu0 0.0
    %297 = vmatpush1.msra.mxu0 0.0
    %298 = vmatprep.mubr.f32.mxu0 0.0
    %299 = vmatmul.mubr.f32.gmra.mrb[0].mxu0 %v56
    %v300 = vpop.f32.mrb[0].mxu0
    %v301 = vadd.f32 0.0, %v300
    %v302 = vpop.f32.mrb[0].mxu0
    %303 = vmatprep.mubr.f32.mxu0 0.0
    %304 = vmatmul.mubr.f32.gmra.mrb[0].mxu0 %v57
    %v305 = vpop.f32.mrb[0].mxu0
    %v306 = vadd.f32 0.0, %v305
    %v307 = vpop.f32.mrb[0].mxu0
    %308 = vmatprep.mubr.f32.mxu0 0.0
    %309 = vmatmul.mubr.f32.gmra.mrb[0].mxu0 %v58
    %v310 = vpop.f32.mrb[0].mxu0
    %v311 = vadd.f32 0.0, %v310
    %v312 = vpop.f32.mrb[0].mxu0
    %313 = vmatprep.mubr.f32.mxu0 0.0
    %314 = vmatmul.mubr.f32.gmra.mrb[0].mxu0 %v59
    %v315 = vpop.f32.mrb[0].mxu0
    %v316 = vadd.f32 0.0, %v315
    %v317 = vpop.f32.mrb[0].mxu0
    %318 = vmatprep.mubr.f32.mxu0 0.0
    %319 = vmatmul.mubr.f32.gmra.mrb[0].mxu0 %v60
    %v320 = vpop.f32.mrb[0].mxu0
    %v321 = vadd.f32 0.0, %v320
    %v322 = vpop.f32.mrb[0].mxu0
    %323 = vmatprep.mubr.f32.mxu0 0.0
    %324 = vmatmul.mubr.f32.gmra.mrb[0].mxu0 %v61
    %v325 = vpop.f32.mrb[0].mxu0
    %v326 = vadd.f32 0.0, %v325
    %v327 = vpop.f32.mrb[0].mxu0
    %328 = vmatprep.mubr.f32.mxu0 0.0
    %329 = vmatmul.mubr.f32.gmra.mrb[0].mxu0 %v62
    %v330 = vpop.f32.mrb[0].mxu0
    %v331 = vadd.f32 0.0, %v330
    %v332 = vpop.f32.mrb[0].mxu0
    %333 = vmatprep.mubr.f32.mxu0 0.0
    %334 = vmatmul.mubr.f32.gmra.mrb[0].mxu0 %v63
    %v335 = vpop.f32.mrb[0].mxu0
    %v336 = vadd.f32 0.0, %v335
    %v337 = vpop.f32.mrb[0].mxu0
    %338 = vmatprep.mubr.f32.mxu0 0.0
    %339 = vmatmul.mubr.f32.gmra.mrb[0].mxu0 %v64
    %v340 = vpop.f32.mrb[0].mxu0
    %v341 = vadd.f32 0.0, %v340
    %v342 = vpop.f32.mrb[0].mxu0
    %343 = vmatprep.mubr.f32.mxu0 0.0
    %344 = vmatmul.mubr.f32.gmra.mrb[0].mxu0 %v65
    %v345 = vpop.f32.mrb[0].mxu0
    %v346 = vadd.f32 0.0, %v345
    %v347 = vpop.f32.mrb[0].mxu0
    %348 = vmatprep.mubr.f32.mxu0 0.0
    %349 = vmatmul.mubr.f32.gmra.mrb[0].mxu0 %v66
    %v350 = vpop.f32.mrb[0].mxu0
    %v351 = vadd.f32 0.0, %v350
    %v352 = vpop.f32.mrb[0].mxu0
    %353 = vmatprep.mubr.f32.mxu0 0.0
    %354 = vmatmul.mubr.f32.gmra.mrb[0].mxu0 %v67
    %v355 = vpop.f32.mrb[0].mxu0
    %v356 = vadd.f32 0.0, %v355
    %v357 = vpop.f32.mrb[0].mxu0
    %358 = vmatprep.mubr.f32.mxu0 0.0
    %359 = vmatmul.mubr.f32.gmra.mrb[0].mxu0 %v68
    %v360 = vpop.f32.mrb[0].mxu0
    %v361 = vadd.f32 0.0, %v360
    %v362 = vpop.f32.mrb[0].mxu0
    %363 = vmatprep.mubr.f32.mxu0 0.0
    %364 = vmatmul.mubr.f32.gmra.mrb[0].mxu0 %v69
    %v365 = vpop.f32.mrb[0].mxu0
    %v366 = vadd.f32 0.0, %v365
    %v367 = vpop.f32.mrb[0].mxu0
    %368 = vmatprep.mubr.f32.mxu0 0.0
    %369 = vmatmul.mubr.f32.gmra.mrb[0].mxu0 %v70
    %v370 = vpop.f32.mrb[0].mxu0
    %v371 = vadd.f32 0.0, %v370
    %v372 = vpop.f32.mrb[0].mxu0
    %373 = vmatprep.mubr.f32.mxu0 0.0
    %374 = vmatmul.mubr.f32.gmra.mrb[0].mxu0 %v71
    %v375 = vpop.f32.mrb[0].mxu0
    %v376 = vadd.f32 0.0, %v375
    %v377 = vpop.f32.mrb[0].mxu0
    %378 = vdwg.mxu0
    %v379 = vmul.f32 %v202, %v202
    %v380 = vmul.f32 %v203, %v203
    %v381 = vmul.f32 %v204, %v204
    %v382 = vmul.f32 %v205, %v205
    %v383 = vmul.f32 %v206, %v206
    %v384 = vmul.f32 %v207, %v207
    %v385 = vmul.f32 %v208, %v208
    %v386 = vmul.f32 %v209, %v209
    %v387 = vmul.f32 %v210, %v210
    %v388 = vmul.f32 %v211, %v211
    %v389 = vmul.f32 %v212, %v212
    %v390 = vmul.f32 %v213, %v213
    %v391 = vmul.f32 %v214, %v214
    %v392 = vmul.f32 %v215, %v215
    %v393 = vmul.f32 %v216, %v216
    %v394 = vmul.f32 %v217, %v217
    %v395 = vmul.f32 %v137, %v379
    %v396 = vmul.f32 %v137, %v380
    %v397 = vmul.f32 %v137, %v381
    %v398 = vmul.f32 %v137, %v382
    %v399 = vmul.f32 %v137, %v383
    %v400 = vmul.f32 %v137, %v384
    %v401 = vmul.f32 %v137, %v385
    %v402 = vmul.f32 %v137, %v386
    %v403 = vmul.f32 %v137, %v387
    %v404 = vmul.f32 %v137, %v388
    %v405 = vmul.f32 %v137, %v389
    %v406 = vmul.f32 %v137, %v390
    %v407 = vmul.f32 %v137, %v391
    %v408 = vmul.f32 %v137, %v392
    %v409 = vmul.f32 %v137, %v393
    %v410 = vmul.f32 %v137, %v394
    %v411 = vmul.f32 %v395, %v72
    %v412 = vmul.f32 %v396, %v73
    %v413 = vmul.f32 %v397, %v74
    %v414 = vmul.f32 %v398, %v75
    %v415 = vmul.f32 %v399, %v76
    %v416 = vmul.f32 %v400, %v77
    %v417 = vmul.f32 %v401, %v78
    %v418 = vmul.f32 %v402, %v79
    %v419 = vmul.f32 %v403, %v80
    %v420 = vmul.f32 %v404, %v81
    %v421 = vmul.f32 %v405, %v82
    %v422 = vmul.f32 %v406, %v83
    %v423 = vmul.f32 %v407, %v84
    %v424 = vmul.f32 %v408, %v85
    %v425 = vmul.f32 %v409, %v86
    %v426 = vmul.f32 %v410, %v87
    %v427 = vmul.f32 %v120, %v202
    %v428 = vmul.f32 %v120, %v203
    %v429 = vmul.f32 %v120, %v204
    %v430 = vmul.f32 %v120, %v205
    %v431 = vmul.f32 %v120, %v206
    %v432 = vmul.f32 %v120, %v207
    %v433 = vmul.f32 %v120, %v208
    %v434 = vmul.f32 %v120, %v209
    %v435 = vmul.f32 %v120, %v210
    %v436 = vmul.f32 %v120, %v211
    %v437 = vmul.f32 %v120, %v212
    %v438 = vmul.f32 %v120, %v213
    %v439 = vmul.f32 %v120, %v214
    %v440 = vmul.f32 %v120, %v215
    %v441 = vmul.f32 %v120, %v216
    %v442 = vmul.f32 %v120, %v217
    %v443 = vmul.f32 %v427, %v301
    %v444 = vmul.f32 %v428, %v306
    %v445 = vmul.f32 %v429, %v311
    %v446 = vmul.f32 %v430, %v316
    %v447 = vmul.f32 %v431, %v321
    %v448 = vmul.f32 %v432, %v326
    %v449 = vmul.f32 %v433, %v331
    %v450 = vmul.f32 %v434, %v336
    %v451 = vmul.f32 %v435, %v341
    %v452 = vmul.f32 %v436, %v346
    %v453 = vmul.f32 %v437, %v351
    %v454 = vmul.f32 %v438, %v356
    %v455 = vmul.f32 %v439, %v361
    %v456 = vmul.f32 %v440, %v366
    %v457 = vmul.f32 %v441, %v371
    %v458 = vmul.f32 %v442, %v376
    %v459 = vadd.f32 %v411, %v443
    %v460 = vadd.f32 %v412, %v444
    %v461 = vadd.f32 %v413, %v445
    %v462 = vadd.f32 %v414, %v446
    %v463 = vadd.f32 %v415, %v447
    %v464 = vadd.f32 %v416, %v448
    %v465 = vadd.f32 %v417, %v449
    %v466 = vadd.f32 %v418, %v450
    %v467 = vadd.f32 %v419, %v451
    %v468 = vadd.f32 %v420, %v452
    %v469 = vadd.f32 %v421, %v453
    %v470 = vadd.f32 %v422, %v454
    %v471 = vadd.f32 %v423, %v455
    %v472 = vadd.f32 %v424, %v456
    %v473 = vadd.f32 %v425, %v457
    %v474 = vadd.f32 %v426, %v458
    %475 = vst [vmem:[#allocation9] sm:$0xff] %v459
    %476 = vst [vmem:[#allocation9 + $0x8] sm:$0xff] %v460
    %477 = vst [vmem:[#allocation9 + $0x10] sm:$0xff] %v461
    %478 = vst [vmem:[#allocation9 + $0x18] sm:$0xff] %v462
    %479 = vst [vmem:[#allocation9 + $0x20] sm:$0xff] %v463
    %480 = vst [vmem:[#allocation9 + $0x28] sm:$0xff] %v464
    %481 = vst [vmem:[#allocation9 + $0x30] sm:$0xff] %v465
    %482 = vst [vmem:[#allocation9 + $0x38] sm:$0xff] %v466
    %483 = vst [vmem:[#allocation9 + $0x40] sm:$0xff] %v467
    %484 = vst [vmem:[#allocation9 + $0x48] sm:$0xff] %v468
    %485 = vst [vmem:[#allocation9 + $0x50] sm:$0xff] %v469
    %486 = vst [vmem:[#allocation9 + $0x58] sm:$0xff] %v470
    %487 = vst [vmem:[#allocation9 + $0x60] sm:$0xff] %v471
    %488 = vst [vmem:[#allocation9 + $0x68] sm:$0xff] %v472
    %489 = vst [vmem:[#allocation9 + $0x70] sm:$0xff] %v473
    %490 = vst [vmem:[#allocation9 + $0x78] sm:$0xff] %v474
    // Predicated region
    $region26: #{tpu_custom_call.1} parent=1 // pred_check
      _
    $region27: #{tpu_custom_call.1} parent=1 // pred_check_branch
      %492 = sbr.rel (0) target = $region29
    $region28: #{tpu_custom_call.1} parent=1 // pred_region
      %s494 = ssub.s32 2048, 2048
      %495 = vsyncadd [#allocation4], %s494
      %s496 = sshll.u32 [#allocation9], 4
      %s497 = int_to_ptr.vmem [resolvable:$true] %s496
      %502 = dma.vmem_to_hbm [thread:$0]  %s497, 2048, %s3, [#allocation4], 128, 128, 8
    $region29: #{tpu_custom_call.1} parent=1 // pred_fallthru
      _
    // Predicated region
    $region30: #{tpu_custom_call.1} parent=1 // pred_check
      _
    $region31: #{tpu_custom_call.1} parent=1 // pred_check_branch
      %504 = sbr.rel (0) target = $region33
    $region32: #{tpu_custom_call.1} parent=1 // pred_region
      %505 = dma.done [#allocation4], 2048
    $region33: #{tpu_custom_call.1} parent=1 // pred_fallthru
      _
    %506 = vsyncpa [#allocation3], 1
    %507 = vsyncpa [#allocation8], 1
    %508 = vsyncpa [#allocation4], 1
    %509 = vsyncpa [#allocation5], 1

</llo_original>
